<compile_context>
chip_gen: v7x
topology: tpu7x:2x2x1
jax: 0.10.0
libtpu: 0.0.40
codegen_flags: <defaults>
</compile_context>

<pallas_src>
import functools
import math

import jax
import jax.numpy as jnp
import numpy as np
from jax.experimental import pallas as pl
from jax.experimental.pallas import tpu as pltpu


def _round_up(x, m):
    return (x + m - 1) // m * m


# --------------------------------------------------------------------------
# Kernel
# --------------------------------------------------------------------------
def quad_kernel(x_ref, w_ref, b_ref, o_ref, *, n_q, P):
    """One batch tile.

    x_ref : (Bt, K)  folded inputs, K = g * n_in            (compute dtype)
    w_ref : (K, (2*n_q + 1) * P)  packed weight             (compute dtype)
    b_ref : (1, P)   bias, tiled g times                    (f32)
    o_ref : (Bt, P)  lane-dense folded output, P = g*n_out  (f32)
    """
    x = x_ref[...]

    # Single fused MXU pass producing all column blocks (each P lanes wide):
    #   blocks [0, n_q)      : quadratic partials  sum_{j>q} x_{r,j} * W_{(q,j),o}
    #   blocks [n_q, 2*n_q)  : selection           x_{r,q} broadcast over n_out lanes
    #   block   2*n_q        : linear              sum_j x_{r,j} * W1[j, o]
    t = jnp.dot(x, w_ref[...], preferred_element_type=jnp.float32)

    acc = b_ref[...] + t[:, 2 * n_q * P:]          # bias + linear term

    # Finish the quadratic contraction with n_q full-lane-width VPU FMAs
    # (f32; no broadcasts, no relayouts).
    # TODO(synk): for large n_in, switch this unrolled loop to
    # lax.fori_loop(..., unroll=True) / chunked accumulation to bound vreg
    # live ranges, and set pipeline_mode=pl.Buffered(1) on the (then large)
    # constant weight/bias BlockSpecs.
    for q in range(n_q):
        acc = acc + t[:, (n_q + q) * P:(n_q + q + 1) * P] * t[:, q * P:(q + 1) * P]

    o_ref[...] = acc.astype(o_ref.dtype)


# --------------------------------------------------------------------------
# One-time parameter packing (out of the forward hot path)
# --------------------------------------------------------------------------
def prepare_quad_params(w, b, n_in, n_out, compute_dtype=jnp.float32):
    """w: (n_out, n_in + L) torch nn.Linear layout; b: (n_out,).

    Returns (w_packed, b_packed, meta):
      w_packed : (K, (2*n_q + 1) * P), K = g*n_in, P = g*n_out, n_q = n_in-1.
                 Column blocks: n_q block-diag quadratic blocks, n_q block-diag
                 0/1 selection blocks, then the block-diag linear block.
      b_packed : (1, P) f32 bias tiled g times.
      meta     : dict(n_q=..., g=...).
    """
    L = n_in * (n_in - 1) // 2
    assert w.shape == (n_out, n_in + L)

    # Fold factor: smallest g with (g * n_out) % 128 == 0 -> lane-dense output.
    g = 128 // math.gcd(n_out, 128)
    P = g * n_out
    K = g * n_in
    n_q = n_in - 1                       # drop the identically-zero last block

    w = np.asarray(w, np.float32)
    b = np.asarray(b, np.float32)

    w1 = w[:, :n_in].T                   # (n_in, n_out)  linear
    w2 = w[:, n_in:].T                   # (L, n_out)     pair weights

    # Scatter strict-upper-triangle pair weights: wq[i, j, :] for i < j.
    # np.triu_indices(k=1) matches torch.triu_indices(..., 1) row-major order.
    iu, ju = np.triu_indices(n_in, k=1)
    wq = np.zeros((n_in, n_in, n_out), np.float32)
    wq[iu, ju] = w2

    def block_diag(m):                   # (n_in, n_out) -> (K, P)
        out = np.zeros((K, P), np.float32)
        for r in range(g):
            out[r * n_in:(r + 1) * n_in, r * n_out:(r + 1) * n_out] = m
        return out

    blocks = []
    for q in range(n_q):                 # quadratic blocks (contract over j)
        blocks.append(block_diag(wq[q]))
    for q in range(n_q):                 # selection blocks: x_{r,q} -> n_out lanes
        s = np.zeros((n_in, n_out), np.float32)
        s[q, :] = 1.0
        blocks.append(block_diag(s))
    blocks.append(block_diag(w1))        # linear block

    w_packed = np.concatenate(blocks, axis=1)          # (K, (2*n_q + 1) * P)
    b_packed = np.tile(b, g).reshape(1, P)

    meta = dict(n_q=n_q, g=g)
    return (jnp.asarray(w_packed, compute_dtype),
            jnp.asarray(b_packed, jnp.float32),
            meta)


# --------------------------------------------------------------------------
# Forward (hot path): one pallas_call over a batch grid
# --------------------------------------------------------------------------
@functools.partial(jax.jit, static_argnames=("n_out", "n_q", "g", "block_rows"))
def quad_forward(x, w_packed, b_packed, *, n_out, n_q, g, block_rows=8192):
    B, n_in = x.shape
    P = b_packed.shape[1]
    K = g * n_in
    N = (2 * n_q + 1) * P
    assert w_packed.shape == (K, N)
    assert P == g * n_out

    # --- batch folding + tile sizing ------------------------------------
    B_fold = pl.cdiv(B, g)
    # Folded rows per grid step: large tile to amortize the ~0.35 us/step
    # pipeline overhead, but clamped so the grid has >= 2 steps (v7x megacore
    # split) and sublane-aligned (multiple of 8).
    block_fold = _round_up(max(8, block_rows // g), 8)
    block_fold = min(block_fold, _round_up(pl.cdiv(B_fold, 2), 8))
    grid = pl.cdiv(B_fold, block_fold)
    B_fold_pad = grid * block_fold
    B_pad = B_fold_pad * g

    xc = x.astype(w_packed.dtype)
    if B_pad != B:
        xc = jnp.pad(xc, ((0, B_pad - B), (0, 0)))
    xf = xc.reshape(B_fold_pad, K)

    # --- explicit VMEM budget (review: v7x 64 MiB physical / 32 MiB scoped,
    # v5e 16 MiB default scoped) ------------------------------------------
    in_bytes = jnp.dtype(w_packed.dtype).itemsize
    est = (2 * block_fold * K * in_bytes        # x tile, double-buffered
           + 2 * block_fold * P * 4             # out tile, double-buffered
           + 2 * K * N * in_bytes + 2 * P * 4   # resident packed weight + bias
           + block_fold * N * 4                 # t intermediate (largest live buf)
           + 2 * block_fold * P * 4)            # acc temporaries
    vmem_limit = int(min(max(2 * est, 32 * 1024 * 1024), 48 * 1024 * 1024))

    kernel = functools.partial(quad_kernel, n_q=n_q, P=P)
    out = pl.pallas_call(
        kernel,
        out_shape=jax.ShapeDtypeStruct((B_fold_pad, P), jnp.float32),
        grid=(grid,),
        in_specs=[
            pl.BlockSpec((block_fold, K), lambda i: (i, 0)),   # x: batch-tiled
            pl.BlockSpec((K, N), lambda i: (0, 0)),            # weight: resident
            pl.BlockSpec((1, P), lambda i: (0, 0)),            # bias: resident
        ],
        out_specs=pl.BlockSpec((block_fold, P), lambda i: (i, 0)),
        compiler_params=pltpu.CompilerParams(
            dimension_semantics=("parallel",),                 # megacore on v7x
            vmem_limit_bytes=vmem_limit),
    )(xf, w_packed, b_packed)

    # Unfold: (B_fold_pad, g*n_out) -> (B_pad, n_out), drop padded rows.
    return out.reshape(B_pad, n_out)[:B]


# --------------------------------------------------------------------------
# Pure-JAX mirror of the PyTorch forward, for verification
# --------------------------------------------------------------------------
def quad_reference(x, w, b, n_in):
    iu, ju = jnp.triu_indices(n_in, k=1)
    x2 = jnp.einsum("bi,bj->bij", x, x)[:, iu, ju]
    feat = jnp.concatenate([x, x2], axis=1)
    return feat @ w.T + b


if __name__ == "__main__":
    B, n_in, n_out = 512, 8, 16
    L = n_in * (n_in - 1) // 2

    key = jax.random.PRNGKey(0)
    kx, kw, kb = jax.random.split(key, 3)

    x = jax.random.normal(kx, (B, n_in), dtype=jnp.float32)
    # deterministic nn.Linear-style init: U(-1/sqrt(fan_in), 1/sqrt(fan_in))
    bound = 1.0 / np.sqrt(n_in + L)
    w = jax.random.uniform(kw, (n_out, n_in + L), jnp.float32, -bound, bound)
    b = jax.random.uniform(kb, (n_out,), jnp.float32, -bound, bound)

    ref = quad_reference(x, w, b, n_in)

    # ---- f32 path (tight correctness check) ----------------------------
    w32, b32, meta = prepare_quad_params(w, b, n_in, n_out, jnp.float32)
    out32 = quad_forward(x, w32, b32, n_out=n_out, n_q=meta["n_q"], g=meta["g"])
    out32 = jax.block_until_ready(out32)
    np.testing.assert_allclose(np.asarray(out32), np.asarray(ref),
                               rtol=1e-5, atol=1e-5)

    # ---- bf16 production path (review item: bf16 inputs, f32 accumulate) --
    wbf, bbf, meta = prepare_quad_params(w, b, n_in, n_out, jnp.bfloat16)
    outbf = quad_forward(x, wbf, bbf, n_out=n_out, n_q=meta["n_q"], g=meta["g"])
    outbf = jax.block_until_ready(outbf)
    # Compare against a reference fed with bf16-rounded inputs (accumulation
    # in both paths is f32), plus a loose sanity check vs the true f32 ref.
    x_bf = x.astype(jnp.bfloat16).astype(jnp.float32)
    w_bf = w.astype(jnp.bfloat16).astype(jnp.float32)
    ref_bf = quad_reference(x_bf, w_bf, b, n_in)
    np.testing.assert_allclose(np.asarray(outbf), np.asarray(ref_bf),
                               rtol=1e-3, atol=1e-3)
    np.testing.assert_allclose(np.asarray(outbf), np.asarray(ref),
                               rtol=1e-1, atol=1e-1)

    print("KERNEL_OK")
</pallas_src>

<mosaic_0001>
module attributes {stable_mosaic.version = 11 : i64} {
  func.func @quad_kernel(%arg0: i32, %arg1: memref<32x64xf32, #tpu.memory_space<vmem>>, %arg2: memref<64x1920xf32, #tpu.memory_space<vmem>>, %arg3: memref<1x128xf32, #tpu.memory_space<vmem>>, %arg4: memref<32x128xf32, #tpu.memory_space<vmem>>) attributes {dimension_semantics = [#tpu.dimension_semantics<parallel>], iteration_bounds = array<i64: 2>, scalar_prefetch = 0 : i64, scratch_operands = 0 : i64, tpu.core_type = #tpu.core_type<tc>, window_params = [{transform_indices = @transform_0, window_bounds = array<i64: 32, 64>}, {pipeline_mode = #tpu.pipeline_mode<synchronous>, transform_indices = @transform_1, window_bounds = array<i64: 64, 1920>}, {pipeline_mode = #tpu.pipeline_mode<synchronous>, transform_indices = @transform_2, window_bounds = array<i64: 1, 128>}, {transform_indices = @transform_3, window_bounds = array<i64: 32, 128>}]} {
    %c0 = arith.constant 0 : index
    %c0_0 = arith.constant 0 : index
    %0 = vector.load %arg1[%c0, %c0_0] : memref<32x64xf32, #tpu.memory_space<vmem>>, vector<32x64xf32>
    %c0_1 = arith.constant 0 : index
    %c0_2 = arith.constant 0 : index
    %1 = vector.load %arg2[%c0_1, %c0_2] : memref<64x1920xf32, #tpu.memory_space<vmem>>, vector<64x1920xf32>
    %cst = arith.constant dense<0.000000e+00> : vector<32x1920xf32>
    %2 = tpu.matmul %0, %1, %cst {dimension_numbers = #tpu.dot_dimension_numbers<[1], [0], [0], [1], [0, 0, 1, 1], [], []>} : vector<32x64xf32>, vector<64x1920xf32>, vector<32x1920xf32> -> vector<32x1920xf32>
    %c0_3 = arith.constant 0 : index
    %c0_4 = arith.constant 0 : index
    %3 = vector.load %arg3[%c0_3, %c0_4] : memref<1x128xf32, #tpu.memory_space<vmem>>, vector<1x128xf32>
    %4 = vector.extract_strided_slice %2 {offsets = [0, 1792], sizes = [32, 128], strides = [1, 1]} : vector<32x1920xf32> to vector<32x128xf32>
    %5 = vector.broadcast %3 : vector<1x128xf32> to vector<32x128xf32>
    %6 = arith.addf %5, %4 : vector<32x128xf32>
    %7 = vector.extract_strided_slice %2 {offsets = [0, 896], sizes = [32, 128], strides = [1, 1]} : vector<32x1920xf32> to vector<32x128xf32>
    %8 = vector.extract_strided_slice %2 {offsets = [0, 0], sizes = [32, 128], strides = [1, 1]} : vector<32x1920xf32> to vector<32x128xf32>
    %9 = arith.mulf %7, %8 : vector<32x128xf32>
    %10 = arith.addf %6, %9 : vector<32x128xf32>
    %11 = vector.extract_strided_slice %2 {offsets = [0, 1024], sizes = [32, 128], strides = [1, 1]} : vector<32x1920xf32> to vector<32x128xf32>
    %12 = vector.extract_strided_slice %2 {offsets = [0, 128], sizes = [32, 128], strides = [1, 1]} : vector<32x1920xf32> to vector<32x128xf32>
    %13 = arith.mulf %11, %12 : vector<32x128xf32>
    %14 = arith.addf %10, %13 : vector<32x128xf32>
    %15 = vector.extract_strided_slice %2 {offsets = [0, 1152], sizes = [32, 128], strides = [1, 1]} : vector<32x1920xf32> to vector<32x128xf32>
    %16 = vector.extract_strided_slice %2 {offsets = [0, 256], sizes = [32, 128], strides = [1, 1]} : vector<32x1920xf32> to vector<32x128xf32>
    %17 = arith.mulf %15, %16 : vector<32x128xf32>
    %18 = arith.addf %14, %17 : vector<32x128xf32>
    %19 = vector.extract_strided_slice %2 {offsets = [0, 1280], sizes = [32, 128], strides = [1, 1]} : vector<32x1920xf32> to vector<32x128xf32>
    %20 = vector.extract_strided_slice %2 {offsets = [0, 384], sizes = [32, 128], strides = [1, 1]} : vector<32x1920xf32> to vector<32x128xf32>
    %21 = arith.mulf %19, %20 : vector<32x128xf32>
    %22 = arith.addf %18, %21 : vector<32x128xf32>
    %23 = vector.extract_strided_slice %2 {offsets = [0, 1408], sizes = [32, 128], strides = [1, 1]} : vector<32x1920xf32> to vector<32x128xf32>
    %24 = vector.extract_strided_slice %2 {offsets = [0, 512], sizes = [32, 128], strides = [1, 1]} : vector<32x1920xf32> to vector<32x128xf32>
    %25 = arith.mulf %23, %24 : vector<32x128xf32>
    %26 = arith.addf %22, %25 : vector<32x128xf32>
    %27 = vector.extract_strided_slice %2 {offsets = [0, 1536], sizes = [32, 128], strides = [1, 1]} : vector<32x1920xf32> to vector<32x128xf32>
    %28 = vector.extract_strided_slice %2 {offsets = [0, 640], sizes = [32, 128], strides = [1, 1]} : vector<32x1920xf32> to vector<32x128xf32>
    %29 = arith.mulf %27, %28 : vector<32x128xf32>
    %30 = arith.addf %26, %29 : vector<32x128xf32>
    %31 = vector.extract_strided_slice %2 {offsets = [0, 1664], sizes = [32, 128], strides = [1, 1]} : vector<32x1920xf32> to vector<32x128xf32>
    %32 = vector.extract_strided_slice %2 {offsets = [0, 768], sizes = [32, 128], strides = [1, 1]} : vector<32x1920xf32> to vector<32x128xf32>
    %33 = arith.mulf %31, %32 : vector<32x128xf32>
    %34 = arith.addf %30, %33 : vector<32x128xf32>
    %c0_5 = arith.constant 0 : index
    %c0_6 = arith.constant 0 : index
    %35 = vector.load %arg4[%c0_5, %c0_6] : memref<32x128xf32, #tpu.memory_space<vmem>>, vector<32x128xf32>
    tpu.vector_store %arg4[%c0_5, %c0_6], %34 {strides = array<i32>} : memref<32x128xf32, #tpu.memory_space<vmem>>, vector<32x128xf32>,
    return
  }
  func.func @transform_0(%arg0: i32) -> (i32, i32) {
    %c0_i32 = arith.constant 0 : i32
    %c0_i32_0 = arith.constant 0 : i32
    return %arg0, %c0_i32 : i32, i32
  }
  func.func @transform_1(%arg0: i32) -> (i32, i32) {
    %c0_i32 = arith.constant 0 : i32
    %c0_i32_0 = arith.constant 0 : i32
    %c0_i32_1 = arith.constant 0 : i32
    return %c0_i32, %c0_i32_0 : i32, i32
  }
  func.func @transform_2(%arg0: i32) -> (i32, i32) {
    %c0_i32 = arith.constant 0 : i32
    %c0_i32_0 = arith.constant 0 : i32
    %c0_i32_1 = arith.constant 0 : i32
    return %c0_i32, %c0_i32_0 : i32, i32
  }
  func.func @transform_3(%arg0: i32) -> (i32, i32) {
    %c0_i32 = arith.constant 0 : i32
    %c0_i32_0 = arith.constant 0 : i32
    return %arg0, %c0_i32 : i32, i32
  }
}

</mosaic_0001>

<llo_original>
// kernel: quad_forward.1
$region0: #{quad_forward.1}
  #allocation0 [shape = 'u32[]', space=smem, size = 0x4, offset = 0x4, fixed_abs, tag = 'smem constant byte address 0x4 - core index']
  #allocation1 [shape = 'u32[144,128]{1,0:T(1,128)}', space=vmem, size = 0x12000, scoped, tag = 'internal scratch']
  %s0 = inlined_call_operand.vmem [shape: f32[64,64], index: 0, kind: input, shape index: {}]
  %s1 = inlined_call_operand.vmem [shape: f32[64,1920], index: 1, kind: input, shape index: {}]
  %s2 = inlined_call_operand.vmem [shape: f32[1,128], index: 2, kind: input, shape index: {}]
  %s3 = inlined_call_operand.vmem [shape: f32[64,128], index: 3, kind: output, shape index: {}]
  %s4 = sld [smem:[#allocation0]]
  $region45: #{quad_forward.1} parent=0
    _
  %s6 = ssub.s32 1, %s4
  %s7 = scalar_select 0, %s6, %s4
  loop: start=0, step=1, limit=4
  $region2: #{quad_forward.1} parent=0 // loop_pre_header
    _
  $region3: #{quad_forward.1} parent=0 // loop_header
    %s9 = sphi 0, %s13
    %p10 = scmp.ge.s32.totalorder %s9, 4
    %s19 = sphi 0, %s21
    %s22 = sphi 0, %s19
    %s23 = sphi 0, %s22
    %s39 = sphi 0, %s23
    %s43 = sphi 0, %s43
    %s45 = sphi 0, %s43
    %s46 = sphi 0, %s45
    %s60 = sphi 0, %s46
    %s64 = sphi 0, %s64
    %s66 = sphi 0, %s64
    %s67 = sphi 0, %s66
    %s81 = sphi 0, %s67
    %s87 = sphi 0, %s89
    %s90 = sphi 0, %s87
    %s91 = sphi 0, %s90
    %s107 = sphi 0, %s91
  $region4: #{quad_forward.1} parent=0 // loop_header_branch
    %12 = sbr.rel (%p10) target = $region8
  $region5: #{quad_forward.1} parent=0 // loop_body
    %s14 = ssub.s32 %s9, 1
    %s15 = ssub.s32 %s9, 2
    %s16 = sadd.s32 %s9, 1
    %s17 = ssub.s32 %s9, %s16
    %p18 = scmp.eq.s32.totalorder %s17, 0
    %s20 = sadd.s32 %s19, 1
    %s21 = scalar_select %p18, %s19, %s20
    %p24 = pneg %p18
    %p25 = scmp.eq.s32.totalorder %s9, 1
    %p26 = por %p24, %p25
    %p27 = scmp.ne.s32.totalorder %s19, %s22
    %p28 = scmp.eq.s32.totalorder %s9, 0
    %p29 = por %p27, %p28
    %p30 = scmp.ne.s32.totalorder %s19, %s22
    %p31 = scmp.eq.s32.totalorder %s14, 1
    %p32 = por %p30, %p31
    %p33 = scmp.ne.s32.totalorder %s22, %s23
    %p34 = scmp.eq.s32.totalorder %s14, 0
    %p35 = por %p33, %p34
    %p36 = scmp.ne.s32.totalorder %s22, %s23
    %p37 = scmp.eq.s32.totalorder %s15, 1
    %p38 = por %p36, %p37
    %p40 = scmp.ne.s32.totalorder %s23, %s39
    %p41 = scmp.eq.s32.totalorder %s15, 0
    %p42 = por %p40, %p41
    %s44 = sadd.s32 %s43, 1
    %p47 = scmp.eq.s32.totalorder %s9, 1
    %p48 = scmp.ne.s32.totalorder %s43, %s45
    %p49 = scmp.eq.s32.totalorder %s9, 0
    %p50 = por %p48, %p49
    %p51 = scmp.ne.s32.totalorder %s43, %s45
    %p52 = scmp.eq.s32.totalorder %s14, 1
    %p53 = por %p51, %p52
    %p54 = scmp.ne.s32.totalorder %s45, %s46
    %p55 = scmp.eq.s32.totalorder %s14, 0
    %p56 = por %p54, %p55
    %p57 = scmp.ne.s32.totalorder %s45, %s46
    %p58 = scmp.eq.s32.totalorder %s15, 1
    %p59 = por %p57, %p58
    %p61 = scmp.ne.s32.totalorder %s46, %s60
    %p62 = scmp.eq.s32.totalorder %s15, 0
    %p63 = por %p61, %p62
    %s65 = sadd.s32 %s64, 1
    %p68 = scmp.eq.s32.totalorder %s9, 1
    %p69 = scmp.ne.s32.totalorder %s64, %s66
    %p70 = scmp.eq.s32.totalorder %s9, 0
    %p71 = por %p69, %p70
    %p72 = scmp.ne.s32.totalorder %s64, %s66
    %p73 = scmp.eq.s32.totalorder %s14, 1
    %p74 = por %p72, %p73
    %p75 = scmp.ne.s32.totalorder %s66, %s67
    %p76 = scmp.eq.s32.totalorder %s14, 0
    %p77 = por %p75, %p76
    %p78 = scmp.ne.s32.totalorder %s66, %s67
    %p79 = scmp.eq.s32.totalorder %s15, 1
    %p80 = por %p78, %p79
    %p82 = scmp.ne.s32.totalorder %s67, %s81
    %p83 = scmp.eq.s32.totalorder %s15, 0
    %p84 = por %p82, %p83
    %s85 = ssub.s32 %s9, %s16
    %p86 = scmp.eq.s32.totalorder %s85, 0
    %s88 = sadd.s32 %s87, 1
    %s89 = scalar_select %p86, %s87, %s88
    %p92 = pneg %p86
    %p93 = scmp.eq.s32.totalorder %s9, 1
    %p94 = por %p92, %p93
    %p95 = scmp.ne.s32.totalorder %s87, %s90
    %p96 = scmp.eq.s32.totalorder %s9, 0
    %p97 = por %p95, %p96
    %p98 = scmp.ne.s32.totalorder %s87, %s90
    %p99 = scmp.eq.s32.totalorder %s14, 1
    %p100 = por %p98, %p99
    %p101 = scmp.ne.s32.totalorder %s90, %s91
    %p102 = scmp.eq.s32.totalorder %s14, 0
    %p103 = por %p101, %p102
    %p104 = scmp.ne.s32.totalorder %s90, %s91
    %p105 = scmp.eq.s32.totalorder %s15, 1
    %p106 = por %p104, %p105
    %p108 = scmp.ne.s32.totalorder %s91, %s107
    %p109 = scmp.eq.s32.totalorder %s15, 0
    %p110 = por %p108, %p109
    %p111 = scmp.le.s32.totalorder 1, %s9
    %p112 = scmp.lt.s32.totalorder %s9, 3
    %p113 = pnand %p111, %p112
    %p114 = pneg %p113
    // Predicated region
    $region9: #{quad_forward.1} parent=5 // pred_check
      _
    $region10: #{quad_forward.1} parent=5 // pred_check_branch
      %116 = sbr.rel (%p113) target = $region12
    $region11: #{quad_forward.1} parent=5 // pred_region
      %s117 = ssub.s32 %s9, 1
      // Predicated region
      $region13: #{quad_forward.1} parent=11 // pred_check
        %p118 = pneg %p56
      $region14: #{quad_forward.1} parent=11 // pred_check_branch
        %120 = sbr.rel (%p118) target = $region16
      $region15: #{quad_forward.1} parent=11 // pred_region
        _
      $region16: #{quad_forward.1} parent=11 // pred_fallthru
        _
      // Predicated region
      $region17: #{quad_forward.1} parent=11 // pred_check
        %p121 = pneg %p77
      $region18: #{quad_forward.1} parent=11 // pred_check_branch
        %123 = sbr.rel (%p121) target = $region20
      $region19: #{quad_forward.1} parent=11 // pred_region
        _
      $region20: #{quad_forward.1} parent=11 // pred_fallthru
        _
    $region12: #{quad_forward.1} parent=5 // pred_fallthru
      _
    %p124 = scmp.lt.s32.totalorder %s9, 2
    // Predicated region
    $region21: #{quad_forward.1} parent=5 // pred_check
      %p125 = pneg %p124
    $region22: #{quad_forward.1} parent=5 // pred_check_branch
      %127 = sbr.rel (%p125) target = $region24
    $region23: #{quad_forward.1} parent=5 // pred_region
      // Predicated region
      $region25: #{quad_forward.1} parent=23 // pred_check
        %p128 = pneg %p29
      $region26: #{quad_forward.1} parent=23 // pred_check_branch
        %130 = sbr.rel (%p128) target = $region28
      $region27: #{quad_forward.1} parent=23 // pred_region
        %s131 = smul.u32 4, %s9
        %p132 = scmp.lt.s32.totalorder %s131, 7
        %s133 = scalar_select %p132, %s131, 7
        %s134 = smul.addr %s133, 8
        %s135 = scalar_lea.vmem %s0, %s134
        %s136 = smul.u32 4, %s9
      $region28: #{quad_forward.1} parent=23 // pred_fallthru
        _
    $region24: #{quad_forward.1} parent=5 // pred_fallthru
      _
    %p137 = scmp.le.s32.totalorder 1, %s9
    %p138 = scmp.lt.s32.totalorder %s9, 3
    %p139 = pnand %p137, %p138
    %p140 = pneg %p139
    // Predicated region
    $region29: #{quad_forward.1} parent=5 // pred_check
      _
    $region30: #{quad_forward.1} parent=5 // pred_check_branch
      %142 = sbr.rel (%p139) target = $region32
    $region31: #{quad_forward.1} parent=5 // pred_region
      %s143 = ssub.s32 %s9, 1
      %s144 = smul.u32 4, %s14
      %p145 = scmp.lt.s32.totalorder %s144, 7
      %s146 = scalar_select %p145, %s144, 7
      %s147 = smul.addr %s146, 8
      %s148 = scalar_lea.vmem %s0, %s147
      %p149 = pneg %p35
      %p150 = pneg %p32
      %p151 = pneg %p56
      %p152 = pneg %p53
      %p153 = pneg %p77
      %p154 = pneg %p74
      %p155 = pneg %p103
      %p156 = pneg %p100
      %s157 = smul.u32 4, %s14
      %p158 = scmp.lt.s32.totalorder %s157, 7
      %s159 = scalar_select %p158, %s157, 7
      %s160 = smul.addr %s159, 8
      %s161 = scalar_lea.vmem %s3, %s160
      %s162 = smul.u32 4, %s14
      %p163 = scmp.lt.s32.totalorder %s162, 7
      %s164 = scalar_select %p163, %s162, 7
      %s165 = smul.addr %s164, 8
      %s166 = scalar_lea.vmem %s0, %s165
      %s167 = smul.u32 4, %s14
      %s168 = smul.u32 4, %s14
      %p169 = scmp.lt.s32.totalorder %s168, 7
      %s170 = scalar_select %p169, %s168, 7
      %s171 = smul.addr %s170, 8
      %s172 = scalar_lea.vmem %s3, %s171
      %s173 = smul.u32 4, %s14
      %v174 = vld [vmem:[%s166] sm:$0xff]
      %v175 = vld [vmem:[%s166 + $0x8] sm:$0xff]
      %v176 = vld [vmem:[%s166 + $0x10] sm:$0xff]
      %v177 = vld [vmem:[%s166 + $0x18] sm:$0xff]
      %v178 = vld [vmem:[%s1] sm:$0xff]
      %v179 = vld [vmem:[%s1 + $0x8] sm:$0xff]
      %v180 = vld [vmem:[%s1 + $0x10] sm:$0xff]
      %v181 = vld [vmem:[%s1 + $0x18] sm:$0xff]
      %v182 = vld [vmem:[%s1 + $0x20] sm:$0xff]
      %v183 = vld [vmem:[%s1 + $0x28] sm:$0xff]
      %v184 = vld [vmem:[%s1 + $0x30] sm:$0xff]
      %v185 = vld [vmem:[%s1 + $0x38] sm:$0xff]
      %v186 = vld [vmem:[%s1 + $0x40] sm:$0xff]
      %v187 = vld [vmem:[%s1 + $0x48] sm:$0xff]
      %v188 = vld [vmem:[%s1 + $0x50] sm:$0xff]
      %v189 = vld [vmem:[%s1 + $0x58] sm:$0xff]
      %v190 = vld [vmem:[%s1 + $0x60] sm:$0xff]
      %v191 = vld [vmem:[%s1 + $0x68] sm:$0xff]
      %v192 = vld [vmem:[%s1 + $0x70] sm:$0xff]
      %v193 = vld [vmem:[%s1 + $0x78] sm:$0xff]
      %v194 = vld [vmem:[%s1 + $0x80] sm:$0xff]
      %v195 = vld [vmem:[%s1 + $0x88] sm:$0xff]
      %v196 = vld [vmem:[%s1 + $0x90] sm:$0xff]
      %v197 = vld [vmem:[%s1 + $0x98] sm:$0xff]
      %v198 = vld [vmem:[%s1 + $0xa0] sm:$0xff]
      %v199 = vld [vmem:[%s1 + $0xa8] sm:$0xff]
      %v200 = vld [vmem:[%s1 + $0xb0] sm:$0xff]
      %v201 = vld [vmem:[%s1 + $0xb8] sm:$0xff]
      %v202 = vld [vmem:[%s1 + $0xc0] sm:$0xff]
      %v203 = vld [vmem:[%s1 + $0xc8] sm:$0xff]
      %v204 = vld [vmem:[%s1 + $0xd0] sm:$0xff]
      %v205 = vld [vmem:[%s1 + $0xd8] sm:$0xff]
      %v206 = vld [vmem:[%s1 + $0xe0] sm:$0xff]
      %v207 = vld [vmem:[%s1 + $0xe8] sm:$0xff]
      %v208 = vld [vmem:[%s1 + $0xf0] sm:$0xff]
      %v209 = vld [vmem:[%s1 + $0xf8] sm:$0xff]
      %v210 = vld [vmem:[%s1 + $0x100] sm:$0xff]
      %v211 = vld [vmem:[%s1 + $0x108] sm:$0xff]
      %v212 = vld [vmem:[%s1 + $0x110] sm:$0xff]
      %v213 = vld [vmem:[%s1 + $0x118] sm:$0xff]
      %v214 = vld [vmem:[%s1 + $0x120] sm:$0xff]
      %v215 = vld [vmem:[%s1 + $0x128] sm:$0xff]
      %v216 = vld [vmem:[%s1 + $0x130] sm:$0xff]
      %v217 = vld [vmem:[%s1 + $0x138] sm:$0xff]
      %v218 = vld [vmem:[%s1 + $0x140] sm:$0xff]
      %v219 = vld [vmem:[%s1 + $0x148] sm:$0xff]
      %v220 = vld [vmem:[%s1 + $0x150] sm:$0xff]
      %v221 = vld [vmem:[%s1 + $0x158] sm:$0xff]
      %v222 = vld [vmem:[%s1 + $0x160] sm:$0xff]
      %v223 = vld [vmem:[%s1 + $0x168] sm:$0xff]
      %v224 = vld [vmem:[%s1 + $0x170] sm:$0xff]
      %v225 = vld [vmem:[%s1 + $0x178] sm:$0xff]
      %v226 = vld [vmem:[%s1 + $0x180] sm:$0xff]
      %v227 = vld [vmem:[%s1 + $0x188] sm:$0xff]
      %v228 = vld [vmem:[%s1 + $0x190] sm:$0xff]
      %v229 = vld [vmem:[%s1 + $0x198] sm:$0xff]
      %v230 = vld [vmem:[%s1 + $0x1a0] sm:$0xff]
      %v231 = vld [vmem:[%s1 + $0x1a8] sm:$0xff]
      %v232 = vld [vmem:[%s1 + $0x1b0] sm:$0xff]
      %v233 = vld [vmem:[%s1 + $0x1b8] sm:$0xff]
      %v234 = vld [vmem:[%s1 + $0x1c0] sm:$0xff]
      %v235 = vld [vmem:[%s1 + $0x1c8] sm:$0xff]
      %v236 = vld [vmem:[%s1 + $0x1d0] sm:$0xff]
      %v237 = vld [vmem:[%s1 + $0x1d8] sm:$0xff]
      %v238 = vld [vmem:[%s1 + $0x1e0] sm:$0xff]
      %v239 = vld [vmem:[%s1 + $0x1e8] sm:$0xff]
      %v240 = vld [vmem:[%s1 + $0x1f0] sm:$0xff]
      %v241 = vld [vmem:[%s1 + $0x1f8] sm:$0xff]
      %v242 = vld [vmem:[%s1 + $0x200] sm:$0xff]
      %v243 = vld [vmem:[%s1 + $0x208] sm:$0xff]
      %v244 = vld [vmem:[%s1 + $0x210] sm:$0xff]
      %v245 = vld [vmem:[%s1 + $0x218] sm:$0xff]
      %v246 = vld [vmem:[%s1 + $0x220] sm:$0xff]
      %v247 = vld [vmem:[%s1 + $0x228] sm:$0xff]
      %v248 = vld [vmem:[%s1 + $0x230] sm:$0xff]
      %v249 = vld [vmem:[%s1 + $0x238] sm:$0xff]
      %v250 = vld [vmem:[%s1 + $0x240] sm:$0xff]
      %v251 = vld [vmem:[%s1 + $0x248] sm:$0xff]
      %v252 = vld [vmem:[%s1 + $0x250] sm:$0xff]
      %v253 = vld [vmem:[%s1 + $0x258] sm:$0xff]
      %v254 = vld [vmem:[%s1 + $0x260] sm:$0xff]
      %v255 = vld [vmem:[%s1 + $0x268] sm:$0xff]
      %v256 = vld [vmem:[%s1 + $0x270] sm:$0xff]
      %v257 = vld [vmem:[%s1 + $0x278] sm:$0xff]
      %v258 = vld [vmem:[%s1 + $0x280] sm:$0xff]
      %v259 = vld [vmem:[%s1 + $0x288] sm:$0xff]
      %v260 = vld [vmem:[%s1 + $0x290] sm:$0xff]
      %v261 = vld [vmem:[%s1 + $0x298] sm:$0xff]
      %v262 = vld [vmem:[%s1 + $0x2a0] sm:$0xff]
      %v263 = vld [vmem:[%s1 + $0x2a8] sm:$0xff]
      %v264 = vld [vmem:[%s1 + $0x2b0] sm:$0xff]
      %v265 = vld [vmem:[%s1 + $0x2b8] sm:$0xff]
      %v266 = vld [vmem:[%s1 + $0x2c0] sm:$0xff]
      %v267 = vld [vmem:[%s1 + $0x2c8] sm:$0xff]
      %v268 = vld [vmem:[%s1 + $0x2d0] sm:$0xff]
      %v269 = vld [vmem:[%s1 + $0x2d8] sm:$0xff]
      %v270 = vld [vmem:[%s1 + $0x2e0] sm:$0xff]
      %v271 = vld [vmem:[%s1 + $0x2e8] sm:$0xff]
      %v272 = vld [vmem:[%s1 + $0x2f0] sm:$0xff]
      %v273 = vld [vmem:[%s1 + $0x2f8] sm:$0xff]
      %v274 = vld [vmem:[%s1 + $0x300] sm:$0xff]
      %v275 = vld [vmem:[%s1 + $0x308] sm:$0xff]
      %v276 = vld [vmem:[%s1 + $0x310] sm:$0xff]
      %v277 = vld [vmem:[%s1 + $0x318] sm:$0xff]
      %v278 = vld [vmem:[%s1 + $0x320] sm:$0xff]
      %v279 = vld [vmem:[%s1 + $0x328] sm:$0xff]
      %v280 = vld [vmem:[%s1 + $0x330] sm:$0xff]
      %v281 = vld [vmem:[%s1 + $0x338] sm:$0xff]
      %v282 = vld [vmem:[%s1 + $0x340] sm:$0xff]
      %v283 = vld [vmem:[%s1 + $0x348] sm:$0xff]
      %v284 = vld [vmem:[%s1 + $0x350] sm:$0xff]
      %v285 = vld [vmem:[%s1 + $0x358] sm:$0xff]
      %v286 = vld [vmem:[%s1 + $0x360] sm:$0xff]
      %v287 = vld [vmem:[%s1 + $0x368] sm:$0xff]
      %v288 = vld [vmem:[%s1 + $0x370] sm:$0xff]
      %v289 = vld [vmem:[%s1 + $0x378] sm:$0xff]
      %v290 = vld [vmem:[%s1 + $0x380] sm:$0xff]
      %v291 = vld [vmem:[%s1 + $0x388] sm:$0xff]
      %v292 = vld [vmem:[%s1 + $0x390] sm:$0xff]
      %v293 = vld [vmem:[%s1 + $0x398] sm:$0xff]
      %v294 = vld [vmem:[%s1 + $0x3a0] sm:$0xff]
      %v295 = vld [vmem:[%s1 + $0x3a8] sm:$0xff]
      %v296 = vld [vmem:[%s1 + $0x3b0] sm:$0xff]
      %v297 = vld [vmem:[%s1 + $0x3b8] sm:$0xff]
      %vm298 = vcmask 523264
      %v300 = vsel %vm298, %v174, 0
      %v303 = vsel %vm298, %v175, 0
      %v306 = vsel %vm298, %v176, 0
      %v309 = vsel %vm298, %v177, 0
      %311 = vmatprep.subr.mxu0 %v179
      %312 = vmatpush1.msra.mxu0 %v178
      %313 = vmatprep.subr.mxu0 %v194
      %314 = vmatpush1.msra.mxu0 %v193
      %315 = vmatprep.subr.mxu0 %v209
      %316 = vmatpush1.msra.mxu0 %v208
      %317 = vmatprep.subr.mxu0 %v224
      %318 = vmatpush1.msra.mxu0 %v223
      %319 = vmatprep.subr.mxu0 %v239
      %320 = vmatpush1.msra.mxu0 %v238
      %321 = vmatprep.subr.mxu0 %v254
      %322 = vmatpush1.msra.mxu0 %v253
      %323 = vmatprep.subr.mxu0 %v269
      %324 = vmatpush1.msra.mxu0 %v268
      %325 = vmatprep.subr.mxu0 %v284
      %326 = vmatpush1.msra.mxu0 %v283
      %327 = vmatprep.subr.mxu0 0.0
      %328 = vmatpush1.msra.mxu0 0.0
      %329 = vmatprep.subr.mxu0 0.0
      %330 = vmatpush1.msra.mxu0 0.0
      %331 = vmatprep.subr.mxu0 0.0
      %332 = vmatpush1.msra.mxu0 0.0
      %333 = vmatprep.subr.mxu0 0.0
      %334 = vmatpush1.msra.mxu0 0.0
      %335 = vmatprep.subr.mxu0 0.0
      %336 = vmatpush1.msra.mxu0 0.0
      %337 = vmatprep.subr.mxu0 0.0
      %338 = vmatpush1.msra.mxu0 0.0
      %339 = vmatprep.subr.mxu0 0.0
      %340 = vmatpush1.msra.mxu0 0.0
      %341 = vmatprep.subr.mxu0 0.0
      %342 = vmatpush1.msra.mxu0 0.0
      %343 = vmatprep.subr.mxu0 0.0
      %344 = vmatpush1.msra.mxu0 0.0
      %345 = vmatprep.subr.mxu0 0.0
      %346 = vmatpush1.msra.mxu0 0.0
      %347 = vmatprep.subr.mxu0 0.0
      %348 = vmatpush1.msra.mxu0 0.0
      %349 = vmatprep.subr.mxu0 0.0
      %350 = vmatpush1.msra.mxu0 0.0
      %351 = vmatprep.subr.mxu0 0.0
      %352 = vmatpush1.msra.mxu0 0.0
      %353 = vmatprep.subr.mxu0 0.0
      %354 = vmatpush1.msra.mxu0 0.0
      %355 = vmatprep.subr.mxu0 0.0
      %356 = vmatpush1.msra.mxu0 0.0
      %357 = vmatprep.subr.mxu0 0.0
      %358 = vmatpush1.msra.mxu0 0.0
      %359 = vmatprep.subr.mxu0 0.0
      %360 = vmatpush1.msra.mxu0 0.0
      %361 = vmatprep.subr.mxu0 0.0
      %362 = vmatpush1.msra.mxu0 0.0
      %363 = vmatprep.subr.mxu0 0.0
      %364 = vmatpush1.msra.mxu0 0.0
      %365 = vmatprep.subr.mxu0 0.0
      %366 = vmatpush1.msra.mxu0 0.0
      %367 = vmatprep.subr.mxu0 0.0
      %368 = vmatpush1.msra.mxu0 0.0
      %369 = vmatprep.subr.mxu0 0.0
      %370 = vmatpush1.msra.mxu0 0.0
      %371 = vmatprep.subr.mxu0 0.0
      %372 = vmatpush1.msra.mxu0 0.0
      %373 = vmatprep.subr.mxu0 0.0
      %374 = vmatpush1.msra.mxu0 0.0
      %375 = vmatprep.mubr.f32.mxu0 0.0
      %376 = vmatmul.mubr.f32.gmra.mrb[0].mxu0 %v300
      %v377 = vpop.f32.mrb[0].mxu0
      %v378 = vadd.f32 0.0, %v377
      %v379 = vpop.f32.mrb[0].mxu0
      %v380 = vadd.f32 0.0, %v379
      %381 = vmatprep.mubr.f32.mxu0 0.0
      %382 = vmatmul.mubr.f32.gmra.mrb[0].mxu0 %v303
      %v383 = vpop.f32.mrb[0].mxu0
      %v384 = vadd.f32 0.0, %v383
      %v385 = vpop.f32.mrb[0].mxu0
      %v386 = vadd.f32 0.0, %v385
      %387 = vmatprep.mubr.f32.mxu0 0.0
      %388 = vmatmul.mubr.f32.gmra.mrb[0].mxu0 %v306
      %v389 = vpop.f32.mrb[0].mxu0
      %v390 = vadd.f32 0.0, %v389
      %v391 = vpop.f32.mrb[0].mxu0
      %v392 = vadd.f32 0.0, %v391
      %393 = vmatprep.mubr.f32.mxu0 0.0
      %394 = vmatmul.mubr.f32.gmra.mrb[0].mxu0 %v309
      %v395 = vpop.f32.mrb[0].mxu0
      %v396 = vadd.f32 0.0, %v395
      %v397 = vpop.f32.mrb[0].mxu0
      %v398 = vadd.f32 0.0, %v397
      %399 = vdwg.mxu0
      %400 = vmatprep.subr.mxu0 %v181
      %401 = vmatpush1.msra.mxu0 %v180
      %402 = vmatprep.subr.mxu0 %v196
      %403 = vmatpush1.msra.mxu0 %v195
      %404 = vmatprep.subr.mxu0 %v211
      %405 = vmatpush1.msra.mxu0 %v210
      %406 = vmatprep.subr.mxu0 %v226
      %407 = vmatpush1.msra.mxu0 %v225
      %408 = vmatprep.subr.mxu0 %v241
      %409 = vmatpush1.msra.mxu0 %v240
      %410 = vmatprep.subr.mxu0 %v256
      %411 = vmatpush1.msra.mxu0 %v255
      %412 = vmatprep.subr.mxu0 %v271
      %413 = vmatpush1.msra.mxu0 %v270
      %414 = vmatprep.subr.mxu0 %v286
      %415 = vmatpush1.msra.mxu0 %v285
      %416 = vmatprep.subr.mxu0 0.0
      %417 = vmatpush1.msra.mxu0 0.0
      %418 = vmatprep.subr.mxu0 0.0
      %419 = vmatpush1.msra.mxu0 0.0
      %420 = vmatprep.subr.mxu0 0.0
      %421 = vmatpush1.msra.mxu0 0.0
      %422 = vmatprep.subr.mxu0 0.0
      %423 = vmatpush1.msra.mxu0 0.0
      %424 = vmatprep.subr.mxu0 0.0
      %425 = vmatpush1.msra.mxu0 0.0
      %426 = vmatprep.subr.mxu0 0.0
      %427 = vmatpush1.msra.mxu0 0.0
      %428 = vmatprep.subr.mxu0 0.0
      %429 = vmatpush1.msra.mxu0 0.0
      %430 = vmatprep.subr.mxu0 0.0
      %431 = vmatpush1.msra.mxu0 0.0
      %432 = vmatprep.subr.mxu0 0.0
      %433 = vmatpush1.msra.mxu0 0.0
      %434 = vmatprep.subr.mxu0 0.0
      %435 = vmatpush1.msra.mxu0 0.0
      %436 = vmatprep.subr.mxu0 0.0
      %437 = vmatpush1.msra.mxu0 0.0
      %438 = vmatprep.subr.mxu0 0.0
      %439 = vmatpush1.msra.mxu0 0.0
      %440 = vmatprep.subr.mxu0 0.0
      %441 = vmatpush1.msra.mxu0 0.0
      %442 = vmatprep.subr.mxu0 0.0
      %443 = vmatpush1.msra.mxu0 0.0
      %444 = vmatprep.subr.mxu0 0.0
      %445 = vmatpush1.msra.mxu0 0.0
      %446 = vmatprep.subr.mxu0 0.0
      %447 = vmatpush1.msra.mxu0 0.0
      %448 = vmatprep.subr.mxu0 0.0
      %449 = vmatpush1.msra.mxu0 0.0
      %450 = vmatprep.subr.mxu0 0.0
      %451 = vmatpush1.msra.mxu0 0.0
      %452 = vmatprep.subr.mxu0 0.0
      %453 = vmatpush1.msra.mxu0 0.0
      %454 = vmatprep.subr.mxu0 0.0
      %455 = vmatpush1.msra.mxu0 0.0
      %456 = vmatprep.subr.mxu0 0.0
      %457 = vmatpush1.msra.mxu0 0.0
      %458 = vmatprep.subr.mxu0 0.0
      %459 = vmatpush1.msra.mxu0 0.0
      %460 = vmatprep.subr.mxu0 0.0
      %461 = vmatpush1.msra.mxu0 0.0
      %462 = vmatprep.subr.mxu0 0.0
      %463 = vmatpush1.msra.mxu0 0.0
      %464 = vmatprep.mubr.f32.mxu0 0.0
      %465 = vmatmul.mubr.f32.gmra.mrb[0].mxu0 %v300
      %v466 = vpop.f32.mrb[0].mxu0
      %v467 = vadd.f32 0.0, %v466
      %v468 = vpop.f32.mrb[0].mxu0
      %v469 = vadd.f32 0.0, %v468
      %470 = vmatprep.mubr.f32.mxu0 0.0
      %471 = vmatmul.mubr.f32.gmra.mrb[0].mxu0 %v303
      %v472 = vpop.f32.mrb[0].mxu0
      %v473 = vadd.f32 0.0, %v472
      %v474 = vpop.f32.mrb[0].mxu0
      %v475 = vadd.f32 0.0, %v474
      %476 = vmatprep.mubr.f32.mxu0 0.0
      %477 = vmatmul.mubr.f32.gmra.mrb[0].mxu0 %v306
      %v478 = vpop.f32.mrb[0].mxu0
      %v479 = vadd.f32 0.0, %v478
      %v480 = vpop.f32.mrb[0].mxu0
      %v481 = vadd.f32 0.0, %v480
      %482 = vmatprep.mubr.f32.mxu0 0.0
      %483 = vmatmul.mubr.f32.gmra.mrb[0].mxu0 %v309
      %v484 = vpop.f32.mrb[0].mxu0
      %v485 = vadd.f32 0.0, %v484
      %v486 = vpop.f32.mrb[0].mxu0
      %v487 = vadd.f32 0.0, %v486
      %488 = vdwg.mxu0
      %489 = vmatprep.subr.mxu0 %v183
      %490 = vmatpush1.msra.mxu0 %v182
      %491 = vmatprep.subr.mxu0 %v198
      %492 = vmatpush1.msra.mxu0 %v197
      %493 = vmatprep.subr.mxu0 %v213
      %494 = vmatpush1.msra.mxu0 %v212
      %495 = vmatprep.subr.mxu0 %v228
      %496 = vmatpush1.msra.mxu0 %v227
      %497 = vmatprep.subr.mxu0 %v243
      %498 = vmatpush1.msra.mxu0 %v242
      %499 = vmatprep.subr.mxu0 %v258
      %500 = vmatpush1.msra.mxu0 %v257
      %501 = vmatprep.subr.mxu0 %v273
      %502 = vmatpush1.msra.mxu0 %v272
      %503 = vmatprep.subr.mxu0 %v288
      %504 = vmatpush1.msra.mxu0 %v287
      %505 = vmatprep.subr.mxu0 0.0
      %506 = vmatpush1.msra.mxu0 0.0
      %507 = vmatprep.subr.mxu0 0.0
      %508 = vmatpush1.msra.mxu0 0.0
      %509 = vmatprep.subr.mxu0 0.0
      %510 = vmatpush1.msra.mxu0 0.0
      %511 = vmatprep.subr.mxu0 0.0
      %512 = vmatpush1.msra.mxu0 0.0
      %513 = vmatprep.subr.mxu0 0.0
      %514 = vmatpush1.msra.mxu0 0.0
      %515 = vmatprep.subr.mxu0 0.0
      %516 = vmatpush1.msra.mxu0 0.0
      %517 = vmatprep.subr.mxu0 0.0
      %518 = vmatpush1.msra.mxu0 0.0
      %519 = vmatprep.subr.mxu0 0.0
      %520 = vmatpush1.msra.mxu0 0.0
      %521 = vmatprep.subr.mxu0 0.0
      %522 = vmatpush1.msra.mxu0 0.0
      %523 = vmatprep.subr.mxu0 0.0
      %524 = vmatpush1.msra.mxu0 0.0
      %525 = vmatprep.subr.mxu0 0.0
      %526 = vmatpush1.msra.mxu0 0.0
      %527 = vmatprep.subr.mxu0 0.0
      %528 = vmatpush1.msra.mxu0 0.0
      %529 = vmatprep.subr.mxu0 0.0
      %530 = vmatpush1.msra.mxu0 0.0
      %531 = vmatprep.subr.mxu0 0.0
      %532 = vmatpush1.msra.mxu0 0.0
      %533 = vmatprep.subr.mxu0 0.0
      %534 = vmatpush1.msra.mxu0 0.0
      %535 = vmatprep.subr.mxu0 0.0
      %536 = vmatpush1.msra.mxu0 0.0
      %537 = vmatprep.subr.mxu0 0.0
      %538 = vmatpush1.msra.mxu0 0.0
      %539 = vmatprep.subr.mxu0 0.0
      %540 = vmatpush1.msra.mxu0 0.0
      %541 = vmatprep.subr.mxu0 0.0
      %542 = vmatpush1.msra.mxu0 0.0
      %543 = vmatprep.subr.mxu0 0.0
      %544 = vmatpush1.msra.mxu0 0.0
      %545 = vmatprep.subr.mxu0 0.0
      %546 = vmatpush1.msra.mxu0 0.0
      %547 = vmatprep.subr.mxu0 0.0
      %548 = vmatpush1.msra.mxu0 0.0
      %549 = vmatprep.subr.mxu0 0.0
      %550 = vmatpush1.msra.mxu0 0.0
      %551 = vmatprep.subr.mxu0 0.0
      %552 = vmatpush1.msra.mxu0 0.0
      %553 = vmatprep.mubr.f32.mxu0 0.0
      %554 = vmatmul.mubr.f32.gmra.mrb[0].mxu0 %v300
      %v555 = vpop.f32.mrb[0].mxu0
      %v556 = vadd.f32 0.0, %v555
      %v557 = vpop.f32.mrb[0].mxu0
      %v558 = vadd.f32 0.0, %v557
      %559 = vmatprep.mubr.f32.mxu0 0.0
      %560 = vmatmul.mubr.f32.gmra.mrb[0].mxu0 %v303
      %v561 = vpop.f32.mrb[0].mxu0
      %v562 = vadd.f32 0.0, %v561
      %v563 = vpop.f32.mrb[0].mxu0
      %v564 = vadd.f32 0.0, %v563
      %565 = vmatprep.mubr.f32.mxu0 0.0
      %566 = vmatmul.mubr.f32.gmra.mrb[0].mxu0 %v306
      %v567 = vpop.f32.mrb[0].mxu0
      %v568 = vadd.f32 0.0, %v567
      %v569 = vpop.f32.mrb[0].mxu0
      %v570 = vadd.f32 0.0, %v569
      %571 = vmatprep.mubr.f32.mxu0 0.0
      %572 = vmatmul.mubr.f32.gmra.mrb[0].mxu0 %v309
      %v573 = vpop.f32.mrb[0].mxu0
      %v574 = vadd.f32 0.0, %v573
      %v575 = vpop.f32.mrb[0].mxu0
      %v576 = vadd.f32 0.0, %v575
      %577 = vdwg.mxu0
      %578 = vmatprep.subr.mxu0 %v185
      %579 = vmatpush1.msra.mxu0 %v184
      %580 = vmatprep.subr.mxu0 %v200
      %581 = vmatpush1.msra.mxu0 %v199
      %582 = vmatprep.subr.mxu0 %v215
      %583 = vmatpush1.msra.mxu0 %v214
      %584 = vmatprep.subr.mxu0 %v230
      %585 = vmatpush1.msra.mxu0 %v229
      %586 = vmatprep.subr.mxu0 %v245
      %587 = vmatpush1.msra.mxu0 %v244
      %588 = vmatprep.subr.mxu0 %v260
      %589 = vmatpush1.msra.mxu0 %v259
      %590 = vmatprep.subr.mxu0 %v275
      %591 = vmatpush1.msra.mxu0 %v274
      %592 = vmatprep.subr.mxu0 %v290
      %593 = vmatpush1.msra.mxu0 %v289
      %594 = vmatprep.subr.mxu0 0.0
      %595 = vmatpush1.msra.mxu0 0.0
      %596 = vmatprep.subr.mxu0 0.0
      %597 = vmatpush1.msra.mxu0 0.0
      %598 = vmatprep.subr.mxu0 0.0
      %599 = vmatpush1.msra.mxu0 0.0
      %600 = vmatprep.subr.mxu0 0.0
      %601 = vmatpush1.msra.mxu0 0.0
      %602 = vmatprep.subr.mxu0 0.0
      %603 = vmatpush1.msra.mxu0 0.0
      %604 = vmatprep.subr.mxu0 0.0
      %605 = vmatpush1.msra.mxu0 0.0
      %606 = vmatprep.subr.mxu0 0.0
      %607 = vmatpush1.msra.mxu0 0.0
      %608 = vmatprep.subr.mxu0 0.0
      %609 = vmatpush1.msra.mxu0 0.0
      %610 = vmatprep.subr.mxu0 0.0
      %611 = vmatpush1.msra.mxu0 0.0
      %612 = vmatprep.subr.mxu0 0.0
      %613 = vmatpush1.msra.mxu0 0.0
      %614 = vmatprep.subr.mxu0 0.0
      %615 = vmatpush1.msra.mxu0 0.0
      %616 = vmatprep.subr.mxu0 0.0
      %617 = vmatpush1.msra.mxu0 0.0
      %618 = vmatprep.subr.mxu0 0.0
      %619 = vmatpush1.msra.mxu0 0.0
      %620 = vmatprep.subr.mxu0 0.0
      %621 = vmatpush1.msra.mxu0 0.0
      %622 = vmatprep.subr.mxu0 0.0
      %623 = vmatpush1.msra.mxu0 0.0
      %624 = vmatprep.subr.mxu0 0.0
      %625 = vmatpush1.msra.mxu0 0.0
      %626 = vmatprep.subr.mxu0 0.0
      %627 = vmatpush1.msra.mxu0 0.0
      %628 = vmatprep.subr.mxu0 0.0
      %629 = vmatpush1.msra.mxu0 0.0
      %630 = vmatprep.subr.mxu0 0.0
      %631 = vmatpush1.msra.mxu0 0.0
      %632 = vmatprep.subr.mxu0 0.0
      %633 = vmatpush1.msra.mxu0 0.0
      %634 = vmatprep.subr.mxu0 0.0
      %635 = vmatpush1.msra.mxu0 0.0
      %636 = vmatprep.subr.mxu0 0.0
      %637 = vmatpush1.msra.mxu0 0.0
      %638 = vmatprep.subr.mxu0 0.0
      %639 = vmatpush1.msra.mxu0 0.0
      %640 = vmatprep.subr.mxu0 0.0
      %641 = vmatpush1.msra.mxu0 0.0
      %642 = vmatprep.mubr.f32.mxu0 0.0
      %643 = vmatmul.mubr.f32.gmra.mrb[0].mxu0 %v300
      %v644 = vpop.f32.mrb[0].mxu0
      %v645 = vadd.f32 0.0, %v644
      %v646 = vpop.f32.mrb[0].mxu0
      %v647 = vadd.f32 0.0, %v646
      %648 = vmatprep.mubr.f32.mxu0 0.0
      %649 = vmatmul.mubr.f32.gmra.mrb[0].mxu0 %v303
      %v650 = vpop.f32.mrb[0].mxu0
      %v651 = vadd.f32 0.0, %v650
      %v652 = vpop.f32.mrb[0].mxu0
      %v653 = vadd.f32 0.0, %v652
      %654 = vmatprep.mubr.f32.mxu0 0.0
      %655 = vmatmul.mubr.f32.gmra.mrb[0].mxu0 %v306
      %v656 = vpop.f32.mrb[0].mxu0
      %v657 = vadd.f32 0.0, %v656
      %v658 = vpop.f32.mrb[0].mxu0
      %v659 = vadd.f32 0.0, %v658
      %660 = vmatprep.mubr.f32.mxu0 0.0
      %661 = vmatmul.mubr.f32.gmra.mrb[0].mxu0 %v309
      %v662 = vpop.f32.mrb[0].mxu0
      %v663 = vadd.f32 0.0, %v662
      %v664 = vpop.f32.mrb[0].mxu0
      %v665 = vadd.f32 0.0, %v664
      %666 = vdwg.mxu0
      %667 = vmatprep.subr.mxu0 %v187
      %668 = vmatpush1.msra.mxu0 %v186
      %669 = vmatprep.subr.mxu0 %v202
      %670 = vmatpush1.msra.mxu0 %v201
      %671 = vmatprep.subr.mxu0 %v217
      %672 = vmatpush1.msra.mxu0 %v216
      %673 = vmatprep.subr.mxu0 %v232
      %674 = vmatpush1.msra.mxu0 %v231
      %675 = vmatprep.subr.mxu0 %v247
      %676 = vmatpush1.msra.mxu0 %v246
      %677 = vmatprep.subr.mxu0 %v262
      %678 = vmatpush1.msra.mxu0 %v261
      %679 = vmatprep.subr.mxu0 %v277
      %680 = vmatpush1.msra.mxu0 %v276
      %681 = vmatprep.subr.mxu0 %v292
      %682 = vmatpush1.msra.mxu0 %v291
      %683 = vmatprep.subr.mxu0 0.0
      %684 = vmatpush1.msra.mxu0 0.0
      %685 = vmatprep.subr.mxu0 0.0
      %686 = vmatpush1.msra.mxu0 0.0
      %687 = vmatprep.subr.mxu0 0.0
      %688 = vmatpush1.msra.mxu0 0.0
      %689 = vmatprep.subr.mxu0 0.0
      %690 = vmatpush1.msra.mxu0 0.0
      %691 = vmatprep.subr.mxu0 0.0
      %692 = vmatpush1.msra.mxu0 0.0
      %693 = vmatprep.subr.mxu0 0.0
      %694 = vmatpush1.msra.mxu0 0.0
      %695 = vmatprep.subr.mxu0 0.0
      %696 = vmatpush1.msra.mxu0 0.0
      %697 = vmatprep.subr.mxu0 0.0
      %698 = vmatpush1.msra.mxu0 0.0
      %699 = vmatprep.subr.mxu0 0.0
      %700 = vmatpush1.msra.mxu0 0.0
      %701 = vmatprep.subr.mxu0 0.0
      %702 = vmatpush1.msra.mxu0 0.0
      %703 = vmatprep.subr.mxu0 0.0
      %704 = vmatpush1.msra.mxu0 0.0
      %705 = vmatprep.subr.mxu0 0.0
      %706 = vmatpush1.msra.mxu0 0.0
      %707 = vmatprep.subr.mxu0 0.0
      %708 = vmatpush1.msra.mxu0 0.0
      %709 = vmatprep.subr.mxu0 0.0
      %710 = vmatpush1.msra.mxu0 0.0
      %711 = vmatprep.subr.mxu0 0.0
      %712 = vmatpush1.msra.mxu0 0.0
      %713 = vmatprep.subr.mxu0 0.0
      %714 = vmatpush1.msra.mxu0 0.0
      %715 = vmatprep.subr.mxu0 0.0
      %716 = vmatpush1.msra.mxu0 0.0
      %717 = vmatprep.subr.mxu0 0.0
      %718 = vmatpush1.msra.mxu0 0.0
      %719 = vmatprep.subr.mxu0 0.0
      %720 = vmatpush1.msra.mxu0 0.0
      %721 = vmatprep.subr.mxu0 0.0
      %722 = vmatpush1.msra.mxu0 0.0
      %723 = vmatprep.subr.mxu0 0.0
      %724 = vmatpush1.msra.mxu0 0.0
      %725 = vmatprep.subr.mxu0 0.0
      %726 = vmatpush1.msra.mxu0 0.0
      %727 = vmatprep.subr.mxu0 0.0
      %728 = vmatpush1.msra.mxu0 0.0
      %729 = vmatprep.subr.mxu0 0.0
      %730 = vmatpush1.msra.mxu0 0.0
      %731 = vmatprep.mubr.f32.mxu0 0.0
      %732 = vmatmul.mubr.f32.gmra.mrb[0].mxu0 %v300
      %v733 = vpop.f32.mrb[0].mxu0
      %v734 = vadd.f32 0.0, %v733
      %v735 = vpop.f32.mrb[0].mxu0
      %v736 = vadd.f32 0.0, %v735
      %737 = vmatprep.mubr.f32.mxu0 0.0
      %738 = vmatmul.mubr.f32.gmra.mrb[0].mxu0 %v303
      %v739 = vpop.f32.mrb[0].mxu0
      %v740 = vadd.f32 0.0, %v739
      %v741 = vpop.f32.mrb[0].mxu0
      %v742 = vadd.f32 0.0, %v741
      %743 = vmatprep.mubr.f32.mxu0 0.0
      %744 = vmatmul.mubr.f32.gmra.mrb[0].mxu0 %v306
      %v745 = vpop.f32.mrb[0].mxu0
      %v746 = vadd.f32 0.0, %v745
      %v747 = vpop.f32.mrb[0].mxu0
      %v748 = vadd.f32 0.0, %v747
      %749 = vmatprep.mubr.f32.mxu0 0.0
      %750 = vmatmul.mubr.f32.gmra.mrb[0].mxu0 %v309
      %v751 = vpop.f32.mrb[0].mxu0
      %v752 = vadd.f32 0.0, %v751
      %v753 = vpop.f32.mrb[0].mxu0
      %v754 = vadd.f32 0.0, %v753
      %755 = vdwg.mxu0
      %756 = vmatprep.subr.mxu0 %v189
      %757 = vmatpush1.msra.mxu0 %v188
      %758 = vmatprep.subr.mxu0 %v204
      %759 = vmatpush1.msra.mxu0 %v203
      %760 = vmatprep.subr.mxu0 %v219
      %761 = vmatpush1.msra.mxu0 %v218
      %762 = vmatprep.subr.mxu0 %v234
      %763 = vmatpush1.msra.mxu0 %v233
      %764 = vmatprep.subr.mxu0 %v249
      %765 = vmatpush1.msra.mxu0 %v248
      %766 = vmatprep.subr.mxu0 %v264
      %767 = vmatpush1.msra.mxu0 %v263
      %768 = vmatprep.subr.mxu0 %v279
      %769 = vmatpush1.msra.mxu0 %v278
      %770 = vmatprep.subr.mxu0 %v294
      %771 = vmatpush1.msra.mxu0 %v293
      %772 = vmatprep.subr.mxu0 0.0
      %773 = vmatpush1.msra.mxu0 0.0
      %774 = vmatprep.subr.mxu0 0.0
      %775 = vmatpush1.msra.mxu0 0.0
      %776 = vmatprep.subr.mxu0 0.0
      %777 = vmatpush1.msra.mxu0 0.0
      %778 = vmatprep.subr.mxu0 0.0
      %779 = vmatpush1.msra.mxu0 0.0
      %780 = vmatprep.subr.mxu0 0.0
      %781 = vmatpush1.msra.mxu0 0.0
      %782 = vmatprep.subr.mxu0 0.0
      %783 = vmatpush1.msra.mxu0 0.0
      %784 = vmatprep.subr.mxu0 0.0
      %785 = vmatpush1.msra.mxu0 0.0
      %786 = vmatprep.subr.mxu0 0.0
      %787 = vmatpush1.msra.mxu0 0.0
      %788 = vmatprep.subr.mxu0 0.0
      %789 = vmatpush1.msra.mxu0 0.0
      %790 = vmatprep.subr.mxu0 0.0
      %791 = vmatpush1.msra.mxu0 0.0
      %792 = vmatprep.subr.mxu0 0.0
      %793 = vmatpush1.msra.mxu0 0.0
      %794 = vmatprep.subr.mxu0 0.0
      %795 = vmatpush1.msra.mxu0 0.0
      %796 = vmatprep.subr.mxu0 0.0
      %797 = vmatpush1.msra.mxu0 0.0
      %798 = vmatprep.subr.mxu0 0.0
      %799 = vmatpush1.msra.mxu0 0.0
      %800 = vmatprep.subr.mxu0 0.0
      %801 = vmatpush1.msra.mxu0 0.0
      %802 = vmatprep.subr.mxu0 0.0
      %803 = vmatpush1.msra.mxu0 0.0
      %804 = vmatprep.subr.mxu0 0.0
      %805 = vmatpush1.msra.mxu0 0.0
      %806 = vmatprep.subr.mxu0 0.0
      %807 = vmatpush1.msra.mxu0 0.0
      %808 = vmatprep.subr.mxu0 0.0
      %809 = vmatpush1.msra.mxu0 0.0
      %810 = vmatprep.subr.mxu0 0.0
      %811 = vmatpush1.msra.mxu0 0.0
      %812 = vmatprep.subr.mxu0 0.0
      %813 = vmatpush1.msra.mxu0 0.0
      %814 = vmatprep.subr.mxu0 0.0
      %815 = vmatpush1.msra.mxu0 0.0
      %816 = vmatprep.subr.mxu0 0.0
      %817 = vmatpush1.msra.mxu0 0.0
      %818 = vmatprep.subr.mxu0 0.0
      %819 = vmatpush1.msra.mxu0 0.0
      %820 = vmatprep.mubr.f32.mxu0 0.0
      %821 = vmatmul.mubr.f32.gmra.mrb[0].mxu0 %v300
      %v822 = vpop.f32.mrb[0].mxu0
      %v823 = vadd.f32 0.0, %v822
      %v824 = vpop.f32.mrb[0].mxu0
      %v825 = vadd.f32 0.0, %v824
      %826 = vmatprep.mubr.f32.mxu0 0.0
      %827 = vmatmul.mubr.f32.gmra.mrb[0].mxu0 %v303
      %v828 = vpop.f32.mrb[0].mxu0
      %v829 = vadd.f32 0.0, %v828
      %v830 = vpop.f32.mrb[0].mxu0
      %v831 = vadd.f32 0.0, %v830
      %832 = vmatprep.mubr.f32.mxu0 0.0
      %833 = vmatmul.mubr.f32.gmra.mrb[0].mxu0 %v306
      %v834 = vpop.f32.mrb[0].mxu0
      %v835 = vadd.f32 0.0, %v834
      %v836 = vpop.f32.mrb[0].mxu0
      %v837 = vadd.f32 0.0, %v836
      %838 = vmatprep.mubr.f32.mxu0 0.0
      %839 = vmatmul.mubr.f32.gmra.mrb[0].mxu0 %v309
      %v840 = vpop.f32.mrb[0].mxu0
      %v841 = vadd.f32 0.0, %v840
      %v842 = vpop.f32.mrb[0].mxu0
      %v843 = vadd.f32 0.0, %v842
      %844 = vdwg.mxu0
      %845 = vmatprep.subr.mxu0 %v191
      %846 = vmatpush1.msra.mxu0 %v190
      %847 = vmatprep.subr.mxu0 %v206
      %848 = vmatpush1.msra.mxu0 %v205
      %849 = vmatprep.subr.mxu0 %v221
      %850 = vmatpush1.msra.mxu0 %v220
      %851 = vmatprep.subr.mxu0 %v236
      %852 = vmatpush1.msra.mxu0 %v235
      %853 = vmatprep.subr.mxu0 %v251
      %854 = vmatpush1.msra.mxu0 %v250
      %855 = vmatprep.subr.mxu0 %v266
      %856 = vmatpush1.msra.mxu0 %v265
      %857 = vmatprep.subr.mxu0 %v281
      %858 = vmatpush1.msra.mxu0 %v280
      %859 = vmatprep.subr.mxu0 %v296
      %860 = vmatpush1.msra.mxu0 %v295
      %861 = vmatprep.subr.mxu0 0.0
      %862 = vmatpush1.msra.mxu0 0.0
      %863 = vmatprep.subr.mxu0 0.0
      %864 = vmatpush1.msra.mxu0 0.0
      %865 = vmatprep.subr.mxu0 0.0
      %866 = vmatpush1.msra.mxu0 0.0
      %867 = vmatprep.subr.mxu0 0.0
      %868 = vmatpush1.msra.mxu0 0.0
      %869 = vmatprep.subr.mxu0 0.0
      %870 = vmatpush1.msra.mxu0 0.0
      %871 = vmatprep.subr.mxu0 0.0
      %872 = vmatpush1.msra.mxu0 0.0
      %873 = vmatprep.subr.mxu0 0.0
      %874 = vmatpush1.msra.mxu0 0.0
      %875 = vmatprep.subr.mxu0 0.0
      %876 = vmatpush1.msra.mxu0 0.0
      %877 = vmatprep.subr.mxu0 0.0
      %878 = vmatpush1.msra.mxu0 0.0
      %879 = vmatprep.subr.mxu0 0.0
      %880 = vmatpush1.msra.mxu0 0.0
      %881 = vmatprep.subr.mxu0 0.0
      %882 = vmatpush1.msra.mxu0 0.0
      %883 = vmatprep.subr.mxu0 0.0
      %884 = vmatpush1.msra.mxu0 0.0
      %885 = vmatprep.subr.mxu0 0.0
      %886 = vmatpush1.msra.mxu0 0.0
      %887 = vmatprep.subr.mxu0 0.0
      %888 = vmatpush1.msra.mxu0 0.0
      %889 = vmatprep.subr.mxu0 0.0
      %890 = vmatpush1.msra.mxu0 0.0
      %891 = vmatprep.subr.mxu0 0.0
      %892 = vmatpush1.msra.mxu0 0.0
      %893 = vmatprep.subr.mxu0 0.0
      %894 = vmatpush1.msra.mxu0 0.0
      %895 = vmatprep.subr.mxu0 0.0
      %896 = vmatpush1.msra.mxu0 0.0
      %897 = vmatprep.subr.mxu0 0.0
      %898 = vmatpush1.msra.mxu0 0.0
      %899 = vmatprep.subr.mxu0 0.0
      %900 = vmatpush1.msra.mxu0 0.0
      %901 = vmatprep.subr.mxu0 0.0
      %902 = vmatpush1.msra.mxu0 0.0
      %903 = vmatprep.subr.mxu0 0.0
      %904 = vmatpush1.msra.mxu0 0.0
      %905 = vmatprep.subr.mxu0 0.0
      %906 = vmatpush1.msra.mxu0 0.0
      %907 = vmatprep.subr.mxu0 0.0
      %908 = vmatpush1.msra.mxu0 0.0
      %909 = vmatprep.mubr.f32.mxu0 0.0
      %910 = vmatmul.mubr.f32.gmra.mrb[0].mxu0 %v300
      %v911 = vpop.f32.mrb[0].mxu0
      %v912 = vadd.f32 0.0, %v911
      %v913 = vpop.f32.mrb[0].mxu0
      %v914 = vadd.f32 0.0, %v913
      %915 = vmatprep.mubr.f32.mxu0 0.0
      %916 = vmatmul.mubr.f32.gmra.mrb[0].mxu0 %v303
      %v917 = vpop.f32.mrb[0].mxu0
      %v918 = vadd.f32 0.0, %v917
      %v919 = vpop.f32.mrb[0].mxu0
      %v920 = vadd.f32 0.0, %v919
      %921 = vmatprep.mubr.f32.mxu0 0.0
      %922 = vmatmul.mubr.f32.gmra.mrb[0].mxu0 %v306
      %v923 = vpop.f32.mrb[0].mxu0
      %v924 = vadd.f32 0.0, %v923
      %v925 = vpop.f32.mrb[0].mxu0
      %v926 = vadd.f32 0.0, %v925
      %927 = vmatprep.mubr.f32.mxu0 0.0
      %928 = vmatmul.mubr.f32.gmra.mrb[0].mxu0 %v309
      %v929 = vpop.f32.mrb[0].mxu0
      %v930 = vadd.f32 0.0, %v929
      %v931 = vpop.f32.mrb[0].mxu0
      %v932 = vadd.f32 0.0, %v931
      %933 = vdwg.mxu0
      %934 = vmatprep.subr.mxu0 0.0
      %935 = vmatpush1.msra.mxu0 %v192
      %936 = vmatprep.subr.mxu0 0.0
      %937 = vmatpush1.msra.mxu0 %v207
      %938 = vmatprep.subr.mxu0 0.0
      %939 = vmatpush1.msra.mxu0 %v222
      %940 = vmatprep.subr.mxu0 0.0
      %941 = vmatpush1.msra.mxu0 %v237
      %942 = vmatprep.subr.mxu0 0.0
      %943 = vmatpush1.msra.mxu0 %v252
      %944 = vmatprep.subr.mxu0 0.0
      %945 = vmatpush1.msra.mxu0 %v267
      %946 = vmatprep.subr.mxu0 0.0
      %947 = vmatpush1.msra.mxu0 %v282
      %948 = vmatprep.subr.mxu0 0.0
      %949 = vmatpush1.msra.mxu0 %v297
      %950 = vmatprep.subr.mxu0 0.0
      %951 = vmatpush1.msra.mxu0 0.0
      %952 = vmatprep.subr.mxu0 0.0
      %953 = vmatpush1.msra.mxu0 0.0
      %954 = vmatprep.subr.mxu0 0.0
      %955 = vmatpush1.msra.mxu0 0.0
      %956 = vmatprep.subr.mxu0 0.0
      %957 = vmatpush1.msra.mxu0 0.0
      %958 = vmatprep.subr.mxu0 0.0
      %959 = vmatpush1.msra.mxu0 0.0
      %960 = vmatprep.subr.mxu0 0.0
      %961 = vmatpush1.msra.mxu0 0.0
      %962 = vmatprep.subr.mxu0 0.0
      %963 = vmatpush1.msra.mxu0 0.0
      %964 = vmatprep.subr.mxu0 0.0
      %965 = vmatpush1.msra.mxu0 0.0
      %966 = vmatprep.subr.mxu0 0.0
      %967 = vmatpush1.msra.mxu0 0.0
      %968 = vmatprep.subr.mxu0 0.0
      %969 = vmatpush1.msra.mxu0 0.0
      %970 = vmatprep.subr.mxu0 0.0
      %971 = vmatpush1.msra.mxu0 0.0
      %972 = vmatprep.subr.mxu0 0.0
      %973 = vmatpush1.msra.mxu0 0.0
      %974 = vmatprep.subr.mxu0 0.0
      %975 = vmatpush1.msra.mxu0 0.0
      %976 = vmatprep.subr.mxu0 0.0
      %977 = vmatpush1.msra.mxu0 0.0
      %978 = vmatprep.subr.mxu0 0.0
      %979 = vmatpush1.msra.mxu0 0.0
      %980 = vmatprep.subr.mxu0 0.0
      %981 = vmatpush1.msra.mxu0 0.0
      %982 = vmatprep.subr.mxu0 0.0
      %983 = vmatpush1.msra.mxu0 0.0
      %984 = vmatprep.subr.mxu0 0.0
      %985 = vmatpush1.msra.mxu0 0.0
      %986 = vmatprep.subr.mxu0 0.0
      %987 = vmatpush1.msra.mxu0 0.0
      %988 = vmatprep.subr.mxu0 0.0
      %989 = vmatpush1.msra.mxu0 0.0
      %990 = vmatprep.subr.mxu0 0.0
      %991 = vmatpush1.msra.mxu0 0.0
      %992 = vmatprep.subr.mxu0 0.0
      %993 = vmatpush1.msra.mxu0 0.0
      %994 = vmatprep.subr.mxu0 0.0
      %995 = vmatpush1.msra.mxu0 0.0
      %996 = vmatprep.subr.mxu0 0.0
      %997 = vmatpush1.msra.mxu0 0.0
      %998 = vmatprep.mubr.f32.mxu0 0.0
      %999 = vmatmul.mubr.f32.gmra.mrb[0].mxu0 %v300
      %v1000 = vpop.f32.mrb[0].mxu0
      %v1001 = vadd.f32 0.0, %v1000
      %v1002 = vpop.f32.mrb[0].mxu0
      %1003 = vmatprep.mubr.f32.mxu0 0.0
      %1004 = vmatmul.mubr.f32.gmra.mrb[0].mxu0 %v303
      %v1005 = vpop.f32.mrb[0].mxu0
      %v1006 = vadd.f32 0.0, %v1005
      %v1007 = vpop.f32.mrb[0].mxu0
      %1008 = vmatprep.mubr.f32.mxu0 0.0
      %1009 = vmatmul.mubr.f32.gmra.mrb[0].mxu0 %v306
      %v1010 = vpop.f32.mrb[0].mxu0
      %v1011 = vadd.f32 0.0, %v1010
      %v1012 = vpop.f32.mrb[0].mxu0
      %1013 = vmatprep.mubr.f32.mxu0 0.0
      %1014 = vmatmul.mubr.f32.gmra.mrb[0].mxu0 %v309
      %v1015 = vpop.f32.mrb[0].mxu0
      %v1016 = vadd.f32 0.0, %v1015
      %v1017 = vpop.f32.mrb[0].mxu0
      %1018 = vdwg.mxu0
      %v1019 = vld [vmem:[%s2] sm:$0x1]
      %v1021 = vlaneseq
      %v1022 = vshrl.u32 %v1021, 7
      %v1023 = vsub.s32 0, %v1022
      %v1024 = vrot.slane %v1019, %v1023
      %v1026 = vadd.f32 %v1024, %v1001
      %v1027 = vadd.f32 %v1024, %v1006
      %v1028 = vadd.f32 %v1024, %v1011
      %v1029 = vadd.f32 %v1024, %v1016
      %v1030 = vmul.f32 %v647, %v378
      %v1031 = vmul.f32 %v653, %v384
      %v1032 = vmul.f32 %v659, %v390
      %v1033 = vmul.f32 %v665, %v396
      %v1034 = vadd.f32 %v1026, %v1030
      %v1035 = vadd.f32 %v1027, %v1031
      %v1036 = vadd.f32 %v1028, %v1032
      %v1037 = vadd.f32 %v1029, %v1033
      %v1038 = vmul.f32 %v734, %v380
      %v1039 = vmul.f32 %v740, %v386
      %v1040 = vmul.f32 %v746, %v392
      %v1041 = vmul.f32 %v752, %v398
      %v1042 = vadd.f32 %v1034, %v1038
      %v1043 = vadd.f32 %v1035, %v1039
      %v1044 = vadd.f32 %v1036, %v1040
      %v1045 = vadd.f32 %v1037, %v1041
      %v1046 = vmul.f32 %v736, %v467
      %v1047 = vmul.f32 %v742, %v473
      %v1048 = vmul.f32 %v748, %v479
      %v1049 = vmul.f32 %v754, %v485
      %v1050 = vadd.f32 %v1042, %v1046
      %v1051 = vadd.f32 %v1043, %v1047
      %v1052 = vadd.f32 %v1044, %v1048
      %v1053 = vadd.f32 %v1045, %v1049
      %v1054 = vmul.f32 %v823, %v469
      %v1055 = vmul.f32 %v829, %v475
      %v1056 = vmul.f32 %v835, %v481
      %v1057 = vmul.f32 %v841, %v487
      %v1058 = vadd.f32 %v1050, %v1054
      %v1059 = vadd.f32 %v1051, %v1055
      %v1060 = vadd.f32 %v1052, %v1056
      %v1061 = vadd.f32 %v1053, %v1057
      %v1062 = vmul.f32 %v825, %v556
      %v1063 = vmul.f32 %v831, %v562
      %v1064 = vmul.f32 %v837, %v568
      %v1065 = vmul.f32 %v843, %v574
      %v1066 = vadd.f32 %v1058, %v1062
      %v1067 = vadd.f32 %v1059, %v1063
      %v1068 = vadd.f32 %v1060, %v1064
      %v1069 = vadd.f32 %v1061, %v1065
      %v1070 = vmul.f32 %v912, %v558
      %v1071 = vmul.f32 %v918, %v564
      %v1072 = vmul.f32 %v924, %v570
      %v1073 = vmul.f32 %v930, %v576
      %v1074 = vadd.f32 %v1066, %v1070
      %v1075 = vadd.f32 %v1067, %v1071
      %v1076 = vadd.f32 %v1068, %v1072
      %v1077 = vadd.f32 %v1069, %v1073
      %v1078 = vmul.f32 %v914, %v645
      %v1079 = vmul.f32 %v920, %v651
      %v1080 = vmul.f32 %v926, %v657
      %v1081 = vmul.f32 %v932, %v663
      %v1082 = vadd.f32 %v1074, %v1078
      %v1083 = vadd.f32 %v1075, %v1079
      %v1084 = vadd.f32 %v1076, %v1080
      %v1085 = vadd.f32 %v1077, %v1081
      %1086 = vst [vmem:[%s172] sm:$0xff] %v1082
      %1087 = vst [vmem:[%s172 + $0x8] sm:$0xff] %v1083
      %1088 = vst [vmem:[%s172 + $0x10] sm:$0xff] %v1084
      %1089 = vst [vmem:[%s172 + $0x18] sm:$0xff] %v1085
      %s1090 = smul.u32 4, %s14
      %p1091 = scmp.lt.s32.totalorder %s1090, 7
      %s1092 = scalar_select %p1091, %s1090, 7
      %s1093 = smul.addr %s1092, 8
      %s1094 = scalar_lea.vmem %s3, %s1093
      // Predicated region
      $region33: #{quad_forward.1} parent=31 // pred_check
        %p1095 = pneg %p100
      $region34: #{quad_forward.1} parent=31 // pred_check_branch
        %1097 = sbr.rel (%p1095) target = $region36
      $region35: #{quad_forward.1} parent=31 // pred_region
        %s1098 = smul.u32 4, %s14
      $region36: #{quad_forward.1} parent=31 // pred_fallthru
        _
    $region32: #{quad_forward.1} parent=5 // pred_fallthru
      _
    %p1099 = scmp.le.s32.totalorder 2, %s9
    // Predicated region
    $region37: #{quad_forward.1} parent=5 // pred_check
      %p1100 = pneg %p1099
    $region38: #{quad_forward.1} parent=5 // pred_check_branch
      %1102 = sbr.rel (%p1100) target = $region40
    $region39: #{quad_forward.1} parent=5 // pred_region
      %s1103 = ssub.s32 %s9, 2
      // Predicated region
      $region41: #{quad_forward.1} parent=39 // pred_check
        %p1104 = pneg %p106
      $region42: #{quad_forward.1} parent=39 // pred_check_branch
        %1106 = sbr.rel (%p1104) target = $region44
      $region43: #{quad_forward.1} parent=39 // pred_region
        %s1107 = smul.u32 4, %s15
        %p1108 = scmp.lt.s32.totalorder %s1107, 7
        %s1109 = scalar_select %p1108, %s1107, 7
        %s1110 = smul.addr %s1109, 8
        %s1111 = scalar_lea.vmem %s3, %s1110
      $region44: #{quad_forward.1} parent=39 // pred_fallthru
        _
    $region40: #{quad_forward.1} parent=5 // pred_fallthru
      _
  $region6: #{quad_forward.1} parent=0 // loop_footer
    %s13 = sadd.s32 1, %s9
  $region7: #{quad_forward.1} parent=0 // loop_footer_branch
    %8 = sbr.rel target = $region3
  $region8: #{quad_forward.1} parent=0 // loop_exit
    _

</llo_original>
